<compile_context>
chip_gen: v7x
topology: tpu7x:2x2x1
jax: 0.10.0
libtpu: 0.0.40
codegen_flags: <defaults>
</compile_context>

<pallas_src>
import jax
import jax.numpy as jnp
from jax.experimental import pallas as pl
from jax.experimental.pallas import tpu as pltpu


def _round_up(x, m):
    return ((x + m - 1) // m) * m


def _mlp_kernel(x_ref, w1_ref, b1_ref, w2_ref, b2_ref, w3_ref, b3_ref, o_ref):
    # fc1 + relu  (bf16 operands on the MXU, f32 accumulation, f32 bias add)
    h1 = jnp.dot(x_ref[...], w1_ref[...], preferred_element_type=jnp.float32)
    h1 = jnp.maximum(h1 + b1_ref[...], 0.0)
    # fc2 + relu
    h2 = jnp.dot(h1.astype(w2_ref.dtype), w2_ref[...],
                 preferred_element_type=jnp.float32)
    h2 = jnp.maximum(h2 + b2_ref[...], 0.0)
    # fc3 (no activation) -> lane-dense (padded-to-128) output slab
    out = jnp.dot(h2.astype(w3_ref.dtype), w3_ref[...],
                  preferred_element_type=jnp.float32) + b3_ref[...]
    o_ref[...] = out.astype(o_ref.dtype)


def node_optimizer_forward(x, params, *, block_batch=256,
                           compute_dtype=jnp.bfloat16):
    """Fused NodeOptimizer forward: relu(fc1) -> relu(fc2) -> fc3."""
    w1, b1, w2, b2, w3, b3 = params
    batch, input_dim = x.shape
    hidden_dim = w1.shape[1]
    output_dim = w3.shape[1]
    out_dtype = x.dtype

    # ---- lane-dense output: pad output features to a multiple of 128 ------
    padded_out = _round_up(output_dim, 128)
    if padded_out != output_dim:
        w3 = jnp.pad(w3, ((0, 0), (0, padded_out - output_dim)))
        b3 = jnp.pad(b3, ((0, 0), (0, padded_out - output_dim)))

    # ---- batch tiling: grid over batch; TB a multiple of 8 sublanes --------
    tb = _round_up(min(block_batch, _round_up(batch, 8)), 8)
    padded_batch = _round_up(batch, tb)
    if padded_batch != batch:
        x = jnp.pad(x, ((0, padded_batch - batch), (0, 0)))
    grid = (padded_batch // tb,)

    # ---- dtypes: bf16 MXU operands (half the DMA bytes), f32 biases --------
    x_c = x.astype(compute_dtype)
    w1_c, w2_c, w3_c = (w.astype(compute_dtype) for w in (w1, w2, w3))
    b1_f, b2_f, b3_f = (b.astype(jnp.float32) for b in (b1, b2, b3))

    x_spec = pl.BlockSpec((tb, input_dim), lambda i: (i, 0))
    out_spec = pl.BlockSpec((tb, padded_out), lambda i: (i, 0))
    # Weights / biases: full, grid-invariant blocks -> resident across steps.
    resident = lambda a: pl.BlockSpec(a.shape, lambda i: (0, 0))

    flops = 2 * padded_batch * (input_dim * hidden_dim
                                + hidden_dim * hidden_dim
                                + hidden_dim * padded_out)
    bytes_accessed = (
        x_c.size * x_c.dtype.itemsize
        + sum(a.size * a.dtype.itemsize
              for a in (w1_c, w2_c, w3_c, b1_f, b2_f, b3_f))
        + padded_batch * padded_out * jnp.dtype(out_dtype).itemsize)

    out_padded = pl.pallas_call(
        _mlp_kernel,
        out_shape=jax.ShapeDtypeStruct((padded_batch, padded_out), out_dtype),
        grid=grid,
        in_specs=[x_spec,
                  resident(w1_c), resident(b1_f),
                  resident(w2_c), resident(b2_f),
                  resident(w3_c), resident(b3_f)],
        out_specs=out_spec,
        compiler_params=pltpu.CompilerParams(
            dimension_semantics=("parallel",)),
        cost_estimate=pl.CostEstimate(flops=flops, transcendentals=0,
                                      bytes_accessed=bytes_accessed),
    )(x_c, w1_c, b1_f, w2_c, b2_f, w3_c, b3_f)

    if padded_batch != batch or padded_out != output_dim:
        out_padded = out_padded[:batch, :output_dim]
    return out_padded


def init_params(key, input_dim, hidden_dim, output_dim):
    """Deterministic init mirroring nn.Linear's U(-1/sqrt(fan_in), 1/sqrt(fan_in))."""
    ks = jax.random.split(key, 6)

    def linear(kw, kb, fan_in, fan_out):
        bound = 1.0 / jnp.sqrt(float(fan_in))
        w = jax.random.uniform(kw, (fan_in, fan_out), jnp.float32, -bound, bound)
        b = jax.random.uniform(kb, (1, fan_out), jnp.float32, -bound, bound)
        return w, b

    w1, b1 = linear(ks[0], ks[1], input_dim, hidden_dim)
    w2, b2 = linear(ks[2], ks[3], hidden_dim, hidden_dim)
    w3, b3 = linear(ks[4], ks[5], hidden_dim, output_dim)
    return (w1, b1, w2, b2, w3, b3)


def reference_forward(x, params):
    """Pure-f32 reference (matches the PyTorch module exactly)."""
    w1, b1, w2, b2, w3, b3 = params
    h1 = jnp.maximum(x @ w1 + b1, 0.0)
    h2 = jnp.maximum(h1 @ w2 + b2, 0.0)
    return h2 @ w3 + b3


def reference_forward_quantized(x, params, compute_dtype=jnp.bfloat16):
    """Reference with identical bf16-operand / f32-accumulate numerics."""
    w1, b1, w2, b2, w3, b3 = params
    xc = x.astype(compute_dtype)
    w1c, w2c, w3c = (w.astype(compute_dtype) for w in (w1, w2, w3))
    h1 = jnp.maximum(
        jnp.dot(xc, w1c, preferred_element_type=jnp.float32) + b1, 0.0)
    h2 = jnp.maximum(
        jnp.dot(h1.astype(compute_dtype), w2c,
                preferred_element_type=jnp.float32) + b2, 0.0)
    out = jnp.dot(h2.astype(compute_dtype), w3c,
                  preferred_element_type=jnp.float32) + b3
    return out.astype(x.dtype)


if __name__ == "__main__":
    key = jax.random.PRNGKey(0)
    k_x, k_p = jax.random.split(key)

    # Many independent "nodes" batched into a single pallas_call:
    # 32 nodes x 8 samples each -> 256 rows -> one grid step of TB=256.
    batch, input_dim, hidden_dim, output_dim = 256, 16, 32, 8
    x = jax.random.normal(k_x, (batch, input_dim), jnp.float32)
    params = init_params(k_p, input_dim, hidden_dim, output_dim)

    out = node_optimizer_forward(x, params)
    out = jax.block_until_ready(out)
    assert out.shape == (batch, output_dim)

    # Tight check vs. a reference with identical bf16/f32-accum numerics.
    ref_q = reference_forward_quantized(x, params)
    assert jnp.allclose(out, ref_q, atol=1e-3, rtol=1e-3)

    # Loose sanity check vs. the full-f32 PyTorch-equivalent reference
    # (bf16 operand quantization accounts for the gap).
    ref_f32 = reference_forward(x, params)
    assert jnp.allclose(out, ref_f32, atol=1e-1, rtol=5e-2)

    print("KERNEL_OK")
</pallas_src>

<mosaic_0001>
module attributes {stable_mosaic.version = 11 : i64} {
  func.func @_mlp_kernel(%arg0: i32, %arg1: memref<256x16xbf16, #tpu.memory_space<vmem>>, %arg2: memref<16x32xbf16, #tpu.memory_space<vmem>>, %arg3: memref<1x32xf32, #tpu.memory_space<vmem>>, %arg4: memref<32x32xbf16, #tpu.memory_space<vmem>>, %arg5: memref<1x32xf32, #tpu.memory_space<vmem>>, %arg6: memref<32x128xbf16, #tpu.memory_space<vmem>>, %arg7: memref<1x128xf32, #tpu.memory_space<vmem>>, %arg8: memref<256x128xf32, #tpu.memory_space<vmem>>) attributes {dimension_semantics = [#tpu.dimension_semantics<parallel>], iteration_bounds = array<i64: 1>, scalar_prefetch = 0 : i64, scratch_operands = 0 : i64, tpu.core_type = #tpu.core_type<tc>, window_params = [{transform_indices = @transform_0, window_bounds = array<i64: 256, 16>}, {pipeline_mode = #tpu.pipeline_mode<synchronous>, transform_indices = @transform_1, window_bounds = array<i64: 16, 32>}, {pipeline_mode = #tpu.pipeline_mode<synchronous>, transform_indices = @transform_2, window_bounds = array<i64: 1, 32>}, {pipeline_mode = #tpu.pipeline_mode<synchronous>, transform_indices = @transform_3, window_bounds = array<i64: 32, 32>}, {pipeline_mode = #tpu.pipeline_mode<synchronous>, transform_indices = @transform_4, window_bounds = array<i64: 1, 32>}, {pipeline_mode = #tpu.pipeline_mode<synchronous>, transform_indices = @transform_5, window_bounds = array<i64: 32, 128>}, {pipeline_mode = #tpu.pipeline_mode<synchronous>, transform_indices = @transform_6, window_bounds = array<i64: 1, 128>}, {transform_indices = @transform_7, window_bounds = array<i64: 256, 128>}]} {
    %c0 = arith.constant 0 : index
    %c0_0 = arith.constant 0 : index
    %0 = vector.load %arg1[%c0, %c0_0] : memref<256x16xbf16, #tpu.memory_space<vmem>>, vector<256x16xbf16>
    %c0_1 = arith.constant 0 : index
    %c0_2 = arith.constant 0 : index
    %1 = vector.load %arg2[%c0_1, %c0_2] : memref<16x32xbf16, #tpu.memory_space<vmem>>, vector<16x32xbf16>
    %cst = arith.constant dense<0.000000e+00> : vector<256x32xf32>
    %2 = tpu.matmul %0, %1, %cst {dimension_numbers = #tpu.dot_dimension_numbers<[1], [0], [0], [1], [0, 0, 1, 1], [], []>} : vector<256x16xbf16>, vector<16x32xbf16>, vector<256x32xf32> -> vector<256x32xf32>
    %c0_3 = arith.constant 0 : index
    %c0_4 = arith.constant 0 : index
    %3 = vector.load %arg3[%c0_3, %c0_4] : memref<1x32xf32, #tpu.memory_space<vmem>>, vector<1x32xf32>
    %4 = vector.broadcast %3 : vector<1x32xf32> to vector<256x32xf32>
    %5 = arith.addf %2, %4 : vector<256x32xf32>
    %cst_5 = arith.constant 0.000000e+00 : f32
    %6 = vector.broadcast %cst_5 : f32 to vector<256x32xf32>
    %7 = arith.maximumf %5, %6 : vector<256x32xf32>
    %8 = arith.truncf %7 : vector<256x32xf32> to vector<256x32xbf16>
    %c0_6 = arith.constant 0 : index
    %c0_7 = arith.constant 0 : index
    %9 = vector.load %arg4[%c0_6, %c0_7] : memref<32x32xbf16, #tpu.memory_space<vmem>>, vector<32x32xbf16>
    %cst_8 = arith.constant dense<0.000000e+00> : vector<256x32xf32>
    %10 = tpu.matmul %8, %9, %cst_8 {dimension_numbers = #tpu.dot_dimension_numbers<[1], [0], [0], [1], [0, 0, 1, 1], [], []>} : vector<256x32xbf16>, vector<32x32xbf16>, vector<256x32xf32> -> vector<256x32xf32>
    %c0_9 = arith.constant 0 : index
    %c0_10 = arith.constant 0 : index
    %11 = vector.load %arg5[%c0_9, %c0_10] : memref<1x32xf32, #tpu.memory_space<vmem>>, vector<1x32xf32>
    %12 = vector.broadcast %11 : vector<1x32xf32> to vector<256x32xf32>
    %13 = arith.addf %10, %12 : vector<256x32xf32>
    %cst_11 = arith.constant 0.000000e+00 : f32
    %14 = vector.broadcast %cst_11 : f32 to vector<256x32xf32>
    %15 = arith.maximumf %13, %14 : vector<256x32xf32>
    %16 = arith.truncf %15 : vector<256x32xf32> to vector<256x32xbf16>
    %c0_12 = arith.constant 0 : index
    %c0_13 = arith.constant 0 : index
    %17 = vector.load %arg6[%c0_12, %c0_13] : memref<32x128xbf16, #tpu.memory_space<vmem>>, vector<32x128xbf16>
    %cst_14 = arith.constant dense<0.000000e+00> : vector<256x128xf32>
    %18 = tpu.matmul %16, %17, %cst_14 {dimension_numbers = #tpu.dot_dimension_numbers<[1], [0], [0], [1], [0, 0, 1, 1], [], []>} : vector<256x32xbf16>, vector<32x128xbf16>, vector<256x128xf32> -> vector<256x128xf32>
    %c0_15 = arith.constant 0 : index
    %c0_16 = arith.constant 0 : index
    %19 = vector.load %arg7[%c0_15, %c0_16] : memref<1x128xf32, #tpu.memory_space<vmem>>, vector<1x128xf32>
    %20 = vector.broadcast %19 : vector<1x128xf32> to vector<256x128xf32>
    %21 = arith.addf %18, %20 : vector<256x128xf32>
    %c0_17 = arith.constant 0 : index
    %c0_18 = arith.constant 0 : index
    %22 = vector.load %arg8[%c0_17, %c0_18] : memref<256x128xf32, #tpu.memory_space<vmem>>, vector<256x128xf32>
    tpu.vector_store %arg8[%c0_17, %c0_18], %21 {strides = array<i32>} : memref<256x128xf32, #tpu.memory_space<vmem>>, vector<256x128xf32>,
    return
  }
  func.func @transform_0(%arg0: i32) -> (i32, i32) {
    %c0_i32 = arith.constant 0 : i32
    %c0_i32_0 = arith.constant 0 : i32
    return %arg0, %c0_i32 : i32, i32
  }
  func.func @transform_1(%arg0: i32) -> (i32, i32) {
    %c0_i32 = arith.constant 0 : i32
    %c0_i32_0 = arith.constant 0 : i32
    %c0_i32_1 = arith.constant 0 : i32
    return %c0_i32, %c0_i32_0 : i32, i32
  }
  func.func @transform_2(%arg0: i32) -> (i32, i32) {
    %c0_i32 = arith.constant 0 : i32
    %c0_i32_0 = arith.constant 0 : i32
    %c0_i32_1 = arith.constant 0 : i32
    return %c0_i32, %c0_i32_0 : i32, i32
  }
  func.func @transform_3(%arg0: i32) -> (i32, i32) {
    %c0_i32 = arith.constant 0 : i32
    %c0_i32_0 = arith.constant 0 : i32
    %c0_i32_1 = arith.constant 0 : i32
    return %c0_i32, %c0_i32_0 : i32, i32
  }
  func.func @transform_4(%arg0: i32) -> (i32, i32) {
    %c0_i32 = arith.constant 0 : i32
    %c0_i32_0 = arith.constant 0 : i32
    %c0_i32_1 = arith.constant 0 : i32
    return %c0_i32, %c0_i32_0 : i32, i32
  }
  func.func @transform_5(%arg0: i32) -> (i32, i32) {
    %c0_i32 = arith.constant 0 : i32
    %c0_i32_0 = arith.constant 0 : i32
    %c0_i32_1 = arith.constant 0 : i32
    return %c0_i32, %c0_i32_0 : i32, i32
  }
  func.func @transform_6(%arg0: i32) -> (i32, i32) {
    %c0_i32 = arith.constant 0 : i32
    %c0_i32_0 = arith.constant 0 : i32
    %c0_i32_1 = arith.constant 0 : i32
    return %c0_i32, %c0_i32_0 : i32, i32
  }
  func.func @transform_7(%arg0: i32) -> (i32, i32) {
    %c0_i32 = arith.constant 0 : i32
    %c0_i32_0 = arith.constant 0 : i32
    return %arg0, %c0_i32 : i32, i32
  }
}

</mosaic_0001>

<llo_original>
// kernel: tpu_custom_call.1
$region0: #{tpu_custom_call.1}
  #allocation0 [shape = 'u32[]', space=smem, size = 0x4, offset = 0x4, fixed_abs, tag = 'smem constant byte address 0x4 - core index']
  #allocation1 [shape = 'u32[144,128]{1,0:T(1,128)}', space=vmem, size = 0x12000, scoped, tag = 'internal scratch']
  %s0 = inlined_call_operand.vmem [shape: bf16[256,16], index: 0, kind: input, shape index: {}]
  %s1 = inlined_call_operand.vmem [shape: bf16[16,32], index: 1, kind: input, shape index: {}]
  %s2 = inlined_call_operand.vmem [shape: f32[1,32], index: 2, kind: input, shape index: {}]
  %s3 = inlined_call_operand.vmem [shape: bf16[32,32], index: 3, kind: input, shape index: {}]
  %s4 = inlined_call_operand.vmem [shape: f32[1,32], index: 4, kind: input, shape index: {}]
  %s5 = inlined_call_operand.vmem [shape: bf16[32,128], index: 5, kind: input, shape index: {}]
  %s6 = inlined_call_operand.vmem [shape: f32[1,128], index: 6, kind: input, shape index: {}]
  %s7 = inlined_call_operand.hbm [shape: f32[256,128], index: 7, kind: output, shape index: {}]
  %s8 = sld [smem:[#allocation0]]
  $region38: #{tpu_custom_call.1} parent=0
    _
  %s10 = ssub.s32 1, %s8
  %s11 = scalar_select 0, %s10, %s8
  $region1: #{tpu_custom_call.1} parent=0
    #allocation2 [shape = 'u8[131072]{0}', space=vmem, size = 0x20000, scoped, tag = 'output window, operand 0, single buffered']
    #allocation3 [shape = 's32[1]{0}', space=sflag, size = 0x4, scoped, tag = 'scoped memory for tpu_custom_call.1']
    %12 = vsyncpa [#allocation3], 0
    // Predicated region
    $region2: #{tpu_custom_call.1} parent=1 // pred_check
      _
    $region3: #{tpu_custom_call.1} parent=1 // pred_check_branch
      %14 = sbr.rel (0) target = $region5
    $region4: #{tpu_custom_call.1} parent=1 // pred_region
      _
    $region5: #{tpu_custom_call.1} parent=1 // pred_fallthru
      _
    // Predicated region
    $region6: #{tpu_custom_call.1} parent=1 // pred_check
      _
    $region7: #{tpu_custom_call.1} parent=1 // pred_check_branch
      %16 = sbr.rel (0) target = $region9
    $region8: #{tpu_custom_call.1} parent=1 // pred_region
      _
    $region9: #{tpu_custom_call.1} parent=1 // pred_fallthru
      _
    // Predicated region
    $region10: #{tpu_custom_call.1} parent=1 // pred_check
      _
    $region11: #{tpu_custom_call.1} parent=1 // pred_check_branch
      %18 = sbr.rel (0) target = $region13
    $region12: #{tpu_custom_call.1} parent=1 // pred_region
      _
    $region13: #{tpu_custom_call.1} parent=1 // pred_fallthru
      _
    // Predicated region
    $region14: #{tpu_custom_call.1} parent=1 // pred_check
      _
    $region15: #{tpu_custom_call.1} parent=1 // pred_check_branch
      %20 = sbr.rel (0) target = $region17
    $region16: #{tpu_custom_call.1} parent=1 // pred_region
      _
    $region17: #{tpu_custom_call.1} parent=1 // pred_fallthru
      _
    // Predicated region
    $region18: #{tpu_custom_call.1} parent=1 // pred_check
      _
    $region19: #{tpu_custom_call.1} parent=1 // pred_check_branch
      %22 = sbr.rel (0) target = $region21
    $region20: #{tpu_custom_call.1} parent=1 // pred_region
      _
    $region21: #{tpu_custom_call.1} parent=1 // pred_fallthru
      _
    // Predicated region
    $region22: #{tpu_custom_call.1} parent=1 // pred_check
      _
    $region23: #{tpu_custom_call.1} parent=1 // pred_check_branch
      %24 = sbr.rel (0) target = $region25
    $region24: #{tpu_custom_call.1} parent=1 // pred_region
      _
    $region25: #{tpu_custom_call.1} parent=1 // pred_fallthru
      _
    // Predicated region
    $region26: #{tpu_custom_call.1} parent=1 // pred_check
      _
    $region27: #{tpu_custom_call.1} parent=1 // pred_check_branch
      %26 = sbr.rel (0) target = $region29
    $region28: #{tpu_custom_call.1} parent=1 // pred_region
      _
    $region29: #{tpu_custom_call.1} parent=1 // pred_fallthru
      _
    %v28 = vld [vmem:[%s0] sm:$0xf]
    %v29 = vld [vmem:[%s0 + $0x4] sm:$0xf]
    %v30 = vld [vmem:[%s0 + $0x8] sm:$0xf]
    %v31 = vld [vmem:[%s0 + $0xc] sm:$0xf]
    %v32 = vld [vmem:[%s0 + $0x10] sm:$0xf]
    %v33 = vld [vmem:[%s0 + $0x14] sm:$0xf]
    %v34 = vld [vmem:[%s0 + $0x18] sm:$0xf]
    %v35 = vld [vmem:[%s0 + $0x1c] sm:$0xf]
    %v36 = vld [vmem:[%s0 + $0x20] sm:$0xf]
    %v37 = vld [vmem:[%s0 + $0x24] sm:$0xf]
    %v38 = vld [vmem:[%s0 + $0x28] sm:$0xf]
    %v39 = vld [vmem:[%s0 + $0x2c] sm:$0xf]
    %v40 = vld [vmem:[%s0 + $0x30] sm:$0xf]
    %v41 = vld [vmem:[%s0 + $0x34] sm:$0xf]
    %v42 = vld [vmem:[%s0 + $0x38] sm:$0xf]
    %v43 = vld [vmem:[%s0 + $0x3c] sm:$0xf]
    %v44 = vld [vmem:[%s0 + $0x40] sm:$0xf]
    %v45 = vld [vmem:[%s0 + $0x44] sm:$0xf]
    %v46 = vld [vmem:[%s0 + $0x48] sm:$0xf]
    %v47 = vld [vmem:[%s0 + $0x4c] sm:$0xf]
    %v48 = vld [vmem:[%s0 + $0x50] sm:$0xf]
    %v49 = vld [vmem:[%s0 + $0x54] sm:$0xf]
    %v50 = vld [vmem:[%s0 + $0x58] sm:$0xf]
    %v51 = vld [vmem:[%s0 + $0x5c] sm:$0xf]
    %v52 = vld [vmem:[%s0 + $0x60] sm:$0xf]
    %v53 = vld [vmem:[%s0 + $0x64] sm:$0xf]
    %v54 = vld [vmem:[%s0 + $0x68] sm:$0xf]
    %v55 = vld [vmem:[%s0 + $0x6c] sm:$0xf]
    %v56 = vld [vmem:[%s0 + $0x70] sm:$0xf]
    %v57 = vld [vmem:[%s0 + $0x74] sm:$0xf]
    %v58 = vld [vmem:[%s0 + $0x78] sm:$0xf]
    %v59 = vld [vmem:[%s0 + $0x7c] sm:$0xf]
    %v60 = vld [vmem:[%s1] sm:$0xf]
    %v61 = vld [vmem:[%s1 + $0x4] sm:$0xf]
    %v62 = vld [vmem:[%s2] sm:$0x1]
    %v64 = vlaneseq
    %v65 = vshrl.u32 %v64, 7
    %v66 = vsub.s32 0, %v65
    %v67 = vrot.slane %v62, %v66
    %v101 = vunpack.c.l.b16 %v28
    %v102 = vunpack.c.l.b16 %v29
    %v103 = vunpack.c.l.b16 %v30
    %v104 = vunpack.c.l.b16 %v31
    %v105 = vunpack.c.l.b16 %v32
    %v106 = vunpack.c.l.b16 %v33
    %v107 = vunpack.c.l.b16 %v34
    %v108 = vunpack.c.l.b16 %v35
    %v109 = vunpack.c.l.b16 %v36
    %v110 = vunpack.c.l.b16 %v37
    %v111 = vunpack.c.l.b16 %v38
    %v112 = vunpack.c.l.b16 %v39
    %v113 = vunpack.c.l.b16 %v40
    %v114 = vunpack.c.l.b16 %v41
    %v115 = vunpack.c.l.b16 %v42
    %v116 = vunpack.c.l.b16 %v43
    %v117 = vunpack.c.l.b16 %v44
    %v118 = vunpack.c.l.b16 %v45
    %v119 = vunpack.c.l.b16 %v46
    %v120 = vunpack.c.l.b16 %v47
    %v121 = vunpack.c.l.b16 %v48
    %v122 = vunpack.c.l.b16 %v49
    %v123 = vunpack.c.l.b16 %v50
    %v124 = vunpack.c.l.b16 %v51
    %v125 = vunpack.c.l.b16 %v52
    %v126 = vunpack.c.l.b16 %v53
    %v127 = vunpack.c.l.b16 %v54
    %v128 = vunpack.c.l.b16 %v55
    %v129 = vunpack.c.l.b16 %v56
    %v130 = vunpack.c.l.b16 %v57
    %v131 = vunpack.c.l.b16 %v58
    %v132 = vunpack.c.l.b16 %v59
    %v133 = vpack.c.b16 %v102, %v101
    %v134 = vpack.c.b16 %v104, %v103
    %v135 = vpack.c.b16 %v106, %v105
    %v136 = vpack.c.b16 %v108, %v107
    %v137 = vpack.c.b16 %v110, %v109
    %v138 = vpack.c.b16 %v112, %v111
    %v139 = vpack.c.b16 %v114, %v113
    %v140 = vpack.c.b16 %v116, %v115
    %v141 = vpack.c.b16 %v118, %v117
    %v142 = vpack.c.b16 %v120, %v119
    %v143 = vpack.c.b16 %v122, %v121
    %v144 = vpack.c.b16 %v124, %v123
    %v145 = vpack.c.b16 %v126, %v125
    %v146 = vpack.c.b16 %v128, %v127
    %v147 = vpack.c.b16 %v130, %v129
    %v148 = vpack.c.b16 %v132, %v131
    %v151 = vunpack.c.l.b16 %v60
    %v152 = vunpack.c.l.b16 %v61
    %v153 = vpack.c.b16 %v152, %v151
    %vm155 = vcmask 130048
    %v157 = vsel %vm155, %v133, 0
    %v160 = vsel %vm155, %v134, 0
    %v163 = vsel %vm155, %v135, 0
    %v166 = vsel %vm155, %v136, 0
    %v169 = vsel %vm155, %v137, 0
    %v172 = vsel %vm155, %v138, 0
    %v175 = vsel %vm155, %v139, 0
    %v178 = vsel %vm155, %v140, 0
    %v181 = vsel %vm155, %v141, 0
    %v184 = vsel %vm155, %v142, 0
    %v187 = vsel %vm155, %v143, 0
    %v190 = vsel %vm155, %v144, 0
    %v193 = vsel %vm155, %v145, 0
    %v196 = vsel %vm155, %v146, 0
    %v199 = vsel %vm155, %v147, 0
    %v202 = vsel %vm155, %v148, 0
    %204 = vmatprep.subr.bf16.mxu0 0
    %205 = vmatpush1.bf16.msra.mxu0 %v153
    %206 = vmatprep.subr.bf16.mxu0 0
    %207 = vmatpush1.bf16.msra.mxu0 0
    %208 = vmatprep.subr.bf16.mxu0 0
    %209 = vmatpush1.bf16.msra.mxu0 0
    %210 = vmatprep.subr.bf16.mxu0 0
    %211 = vmatpush1.bf16.msra.mxu0 0
    %212 = vmatprep.subr.bf16.mxu0 0
    %213 = vmatpush1.bf16.msra.mxu0 0
    %214 = vmatprep.subr.bf16.mxu0 0
    %215 = vmatpush1.bf16.msra.mxu0 0
    %216 = vmatprep.subr.bf16.mxu0 0
    %217 = vmatpush1.bf16.msra.mxu0 0
    %218 = vmatprep.subr.bf16.mxu0 0
    %219 = vmatpush1.bf16.msra.mxu0 0
    %220 = vmatprep.subr.bf16.mxu0 0
    %221 = vmatpush1.bf16.msra.mxu0 0
    %222 = vmatprep.subr.bf16.mxu0 0
    %223 = vmatpush1.bf16.msra.mxu0 0
    %224 = vmatprep.subr.bf16.mxu0 0
    %225 = vmatpush1.bf16.msra.mxu0 0
    %226 = vmatprep.subr.bf16.mxu0 0
    %227 = vmatpush1.bf16.msra.mxu0 0
    %228 = vmatprep.subr.bf16.mxu0 0
    %229 = vmatpush1.bf16.msra.mxu0 0
    %230 = vmatprep.subr.bf16.mxu0 0
    %231 = vmatpush1.bf16.msra.mxu0 0
    %232 = vmatprep.subr.bf16.mxu0 0
    %233 = vmatpush1.bf16.msra.mxu0 0
    %234 = vmatprep.subr.bf16.mxu0 0
    %235 = vmatpush1.bf16.msra.mxu0 0
    %236 = vmatprep.mubr.bf16.mxu0 0
    %237 = vmatmul.mubr.bf16.gmra.mrb[0].mxu0 %v157
    %v238 = vpop.f32.mrb[0].mxu0
    %v239 = vadd.f32 %v67, %v238
    %v240 = vpop.f32.mrb[0].mxu0
    %v241 = vpop.f32.mrb[0].mxu0
    %v242 = vadd.f32 %v67, %v241
    %v243 = vpop.f32.mrb[0].mxu0
    %244 = vmatprep.mubr.bf16.mxu0 0
    %245 = vmatmul.mubr.bf16.gmra.mrb[0].mxu0 %v160
    %v246 = vpop.f32.mrb[0].mxu0
    %v247 = vadd.f32 %v67, %v246
    %v248 = vpop.f32.mrb[0].mxu0
    %v249 = vpop.f32.mrb[0].mxu0
    %v250 = vadd.f32 %v67, %v249
    %v251 = vpop.f32.mrb[0].mxu0
    %252 = vmatprep.mubr.bf16.mxu0 0
    %253 = vmatmul.mubr.bf16.gmra.mrb[0].mxu0 %v163
    %v254 = vpop.f32.mrb[0].mxu0
    %v255 = vadd.f32 %v67, %v254
    %v256 = vpop.f32.mrb[0].mxu0
    %v257 = vpop.f32.mrb[0].mxu0
    %v258 = vadd.f32 %v67, %v257
    %v259 = vpop.f32.mrb[0].mxu0
    %260 = vmatprep.mubr.bf16.mxu0 0
    %261 = vmatmul.mubr.bf16.gmra.mrb[0].mxu0 %v166
    %v262 = vpop.f32.mrb[0].mxu0
    %v263 = vadd.f32 %v67, %v262
    %v264 = vpop.f32.mrb[0].mxu0
    %v265 = vpop.f32.mrb[0].mxu0
    %v266 = vadd.f32 %v67, %v265
    %v267 = vpop.f32.mrb[0].mxu0
    %268 = vmatprep.mubr.bf16.mxu0 0
    %269 = vmatmul.mubr.bf16.gmra.mrb[0].mxu0 %v169
    %v270 = vpop.f32.mrb[0].mxu0
    %v271 = vadd.f32 %v67, %v270
    %v272 = vpop.f32.mrb[0].mxu0
    %v273 = vpop.f32.mrb[0].mxu0
    %v274 = vadd.f32 %v67, %v273
    %v275 = vpop.f32.mrb[0].mxu0
    %276 = vmatprep.mubr.bf16.mxu0 0
    %277 = vmatmul.mubr.bf16.gmra.mrb[0].mxu0 %v172
    %v278 = vpop.f32.mrb[0].mxu0
    %v279 = vadd.f32 %v67, %v278
    %v280 = vpop.f32.mrb[0].mxu0
    %v281 = vpop.f32.mrb[0].mxu0
    %v282 = vadd.f32 %v67, %v281
    %v283 = vpop.f32.mrb[0].mxu0
    %284 = vmatprep.mubr.bf16.mxu0 0
    %285 = vmatmul.mubr.bf16.gmra.mrb[0].mxu0 %v175
    %v286 = vpop.f32.mrb[0].mxu0
    %v287 = vadd.f32 %v67, %v286
    %v288 = vpop.f32.mrb[0].mxu0
    %v289 = vpop.f32.mrb[0].mxu0
    %v290 = vadd.f32 %v67, %v289
    %v291 = vpop.f32.mrb[0].mxu0
    %292 = vmatprep.mubr.bf16.mxu0 0
    %293 = vmatmul.mubr.bf16.gmra.mrb[0].mxu0 %v178
    %v294 = vpop.f32.mrb[0].mxu0
    %v295 = vadd.f32 %v67, %v294
    %v296 = vpop.f32.mrb[0].mxu0
    %v297 = vpop.f32.mrb[0].mxu0
    %v298 = vadd.f32 %v67, %v297
    %v299 = vpop.f32.mrb[0].mxu0
    %300 = vmatprep.mubr.bf16.mxu0 0
    %301 = vmatmul.mubr.bf16.gmra.mrb[0].mxu0 %v181
    %v302 = vpop.f32.mrb[0].mxu0
    %v303 = vadd.f32 %v67, %v302
    %v304 = vpop.f32.mrb[0].mxu0
    %v305 = vpop.f32.mrb[0].mxu0
    %v306 = vadd.f32 %v67, %v305
    %v307 = vpop.f32.mrb[0].mxu0
    %308 = vmatprep.mubr.bf16.mxu0 0
    %309 = vmatmul.mubr.bf16.gmra.mrb[0].mxu0 %v184
    %v310 = vpop.f32.mrb[0].mxu0
    %v311 = vadd.f32 %v67, %v310
    %v312 = vpop.f32.mrb[0].mxu0
    %v313 = vpop.f32.mrb[0].mxu0
    %v314 = vadd.f32 %v67, %v313
    %v315 = vpop.f32.mrb[0].mxu0
    %316 = vmatprep.mubr.bf16.mxu0 0
    %317 = vmatmul.mubr.bf16.gmra.mrb[0].mxu0 %v187
    %v318 = vpop.f32.mrb[0].mxu0
    %v319 = vadd.f32 %v67, %v318
    %v320 = vpop.f32.mrb[0].mxu0
    %v321 = vpop.f32.mrb[0].mxu0
    %v322 = vadd.f32 %v67, %v321
    %v323 = vpop.f32.mrb[0].mxu0
    %324 = vmatprep.mubr.bf16.mxu0 0
    %325 = vmatmul.mubr.bf16.gmra.mrb[0].mxu0 %v190
    %v326 = vpop.f32.mrb[0].mxu0
    %v327 = vadd.f32 %v67, %v326
    %v328 = vpop.f32.mrb[0].mxu0
    %v329 = vpop.f32.mrb[0].mxu0
    %v330 = vadd.f32 %v67, %v329
    %v331 = vpop.f32.mrb[0].mxu0
    %332 = vmatprep.mubr.bf16.mxu0 0
    %333 = vmatmul.mubr.bf16.gmra.mrb[0].mxu0 %v193
    %v334 = vpop.f32.mrb[0].mxu0
    %v335 = vadd.f32 %v67, %v334
    %v336 = vpop.f32.mrb[0].mxu0
    %v337 = vpop.f32.mrb[0].mxu0
    %v338 = vadd.f32 %v67, %v337
    %v339 = vpop.f32.mrb[0].mxu0
    %340 = vmatprep.mubr.bf16.mxu0 0
    %341 = vmatmul.mubr.bf16.gmra.mrb[0].mxu0 %v196
    %v342 = vpop.f32.mrb[0].mxu0
    %v343 = vadd.f32 %v67, %v342
    %v344 = vpop.f32.mrb[0].mxu0
    %v345 = vpop.f32.mrb[0].mxu0
    %v346 = vadd.f32 %v67, %v345
    %v347 = vpop.f32.mrb[0].mxu0
    %348 = vmatprep.mubr.bf16.mxu0 0
    %349 = vmatmul.mubr.bf16.gmra.mrb[0].mxu0 %v199
    %v350 = vpop.f32.mrb[0].mxu0
    %v351 = vadd.f32 %v67, %v350
    %v352 = vpop.f32.mrb[0].mxu0
    %v353 = vpop.f32.mrb[0].mxu0
    %v354 = vadd.f32 %v67, %v353
    %v355 = vpop.f32.mrb[0].mxu0
    %356 = vmatprep.mubr.bf16.mxu0 0
    %357 = vmatmul.mubr.bf16.gmra.mrb[0].mxu0 %v202
    %v358 = vpop.f32.mrb[0].mxu0
    %v359 = vadd.f32 %v67, %v358
    %v360 = vpop.f32.mrb[0].mxu0
    %v361 = vpop.f32.mrb[0].mxu0
    %v362 = vadd.f32 %v67, %v361
    %v363 = vpop.f32.mrb[0].mxu0
    %364 = vdwg.mxu0
    %v365 = vmax.f32 %v239, 0.0
    %v366 = vmax.f32 %v242, 0.0
    %v367 = vmax.f32 %v247, 0.0
    %v368 = vmax.f32 %v250, 0.0
    %v369 = vmax.f32 %v255, 0.0
    %v370 = vmax.f32 %v258, 0.0
    %v371 = vmax.f32 %v263, 0.0
    %v372 = vmax.f32 %v266, 0.0
    %v373 = vmax.f32 %v271, 0.0
    %v374 = vmax.f32 %v274, 0.0
    %v375 = vmax.f32 %v279, 0.0
    %v376 = vmax.f32 %v282, 0.0
    %v377 = vmax.f32 %v287, 0.0
    %v378 = vmax.f32 %v290, 0.0
    %v379 = vmax.f32 %v295, 0.0
    %v380 = vmax.f32 %v298, 0.0
    %v381 = vmax.f32 %v303, 0.0
    %v382 = vmax.f32 %v306, 0.0
    %v383 = vmax.f32 %v311, 0.0
    %v384 = vmax.f32 %v314, 0.0
    %v385 = vmax.f32 %v319, 0.0
    %v386 = vmax.f32 %v322, 0.0
    %v387 = vmax.f32 %v327, 0.0
    %v388 = vmax.f32 %v330, 0.0
    %v389 = vmax.f32 %v335, 0.0
    %v390 = vmax.f32 %v338, 0.0
    %v391 = vmax.f32 %v343, 0.0
    %v392 = vmax.f32 %v346, 0.0
    %v393 = vmax.f32 %v351, 0.0
    %v394 = vmax.f32 %v354, 0.0
    %v395 = vmax.f32 %v359, 0.0
    %v396 = vmax.f32 %v362, 0.0
    %v397 = vpack.c.bf16 %v366, %v365
    %v398 = vpack.c.bf16 %v368, %v367
    %v399 = vpack.c.bf16 %v370, %v369
    %v400 = vpack.c.bf16 %v372, %v371
    %v401 = vpack.c.bf16 %v374, %v373
    %v402 = vpack.c.bf16 %v376, %v375
    %v403 = vpack.c.bf16 %v378, %v377
    %v404 = vpack.c.bf16 %v380, %v379
    %v405 = vpack.c.bf16 %v382, %v381
    %v406 = vpack.c.bf16 %v384, %v383
    %v407 = vpack.c.bf16 %v386, %v385
    %v408 = vpack.c.bf16 %v388, %v387
    %v409 = vpack.c.bf16 %v390, %v389
    %v410 = vpack.c.bf16 %v392, %v391
    %v411 = vpack.c.bf16 %v394, %v393
    %v412 = vpack.c.bf16 %v396, %v395
    %v413 = vld [vmem:[%s3] sm:$0xf]
    %v414 = vld [vmem:[%s3 + $0x4] sm:$0xf]
    %v415 = vld [vmem:[%s3 + $0x8] sm:$0xf]
    %v416 = vld [vmem:[%s3 + $0xc] sm:$0xf]
    %v417 = vld [vmem:[%s4] sm:$0x1]
    %v419 = vlaneseq
    %v420 = vshrl.u32 %v419, 7
    %v421 = vsub.s32 0, %v420
    %v422 = vrot.slane %v417, %v421
    %v428 = vunpack.c.l.b16 %v413
    %v429 = vunpack.c.l.b16 %v414
    %v430 = vunpack.c.l.b16 %v415
    %v431 = vunpack.c.l.b16 %v416
    %v432 = vpack.c.b16 %v429, %v428
    %v433 = vpack.c.b16 %v431, %v430
    %vm436 = vcmask 261120
    %v438 = vsel %vm436, %v397, 0
    %v441 = vsel %vm436, %v398, 0
    %v444 = vsel %vm436, %v399, 0
    %v447 = vsel %vm436, %v400, 0
    %v450 = vsel %vm436, %v401, 0
    %v453 = vsel %vm436, %v402, 0
    %v456 = vsel %vm436, %v403, 0
    %v459 = vsel %vm436, %v404, 0
    %v462 = vsel %vm436, %v405, 0
    %v465 = vsel %vm436, %v406, 0
    %v468 = vsel %vm436, %v407, 0
    %v471 = vsel %vm436, %v408, 0
    %v474 = vsel %vm436, %v409, 0
    %v477 = vsel %vm436, %v410, 0
    %v480 = vsel %vm436, %v411, 0
    %v483 = vsel %vm436, %v412, 0
    %485 = vmatprep.subr.bf16.mxu0 0
    %486 = vmatpush1.bf16.msra.mxu0 %v432
    %487 = vmatprep.subr.bf16.mxu0 0
    %488 = vmatpush1.bf16.msra.mxu0 %v433
    %489 = vmatprep.subr.bf16.mxu0 0
    %490 = vmatpush1.bf16.msra.mxu0 0
    %491 = vmatprep.subr.bf16.mxu0 0
    %492 = vmatpush1.bf16.msra.mxu0 0
    %493 = vmatprep.subr.bf16.mxu0 0
    %494 = vmatpush1.bf16.msra.mxu0 0
    %495 = vmatprep.subr.bf16.mxu0 0
    %496 = vmatpush1.bf16.msra.mxu0 0
    %497 = vmatprep.subr.bf16.mxu0 0
    %498 = vmatpush1.bf16.msra.mxu0 0
    %499 = vmatprep.subr.bf16.mxu0 0
    %500 = vmatpush1.bf16.msra.mxu0 0
    %501 = vmatprep.subr.bf16.mxu0 0
    %502 = vmatpush1.bf16.msra.mxu0 0
    %503 = vmatprep.subr.bf16.mxu0 0
    %504 = vmatpush1.bf16.msra.mxu0 0
    %505 = vmatprep.subr.bf16.mxu0 0
    %506 = vmatpush1.bf16.msra.mxu0 0
    %507 = vmatprep.subr.bf16.mxu0 0
    %508 = vmatpush1.bf16.msra.mxu0 0
    %509 = vmatprep.subr.bf16.mxu0 0
    %510 = vmatpush1.bf16.msra.mxu0 0
    %511 = vmatprep.subr.bf16.mxu0 0
    %512 = vmatpush1.bf16.msra.mxu0 0
    %513 = vmatprep.subr.bf16.mxu0 0
    %514 = vmatpush1.bf16.msra.mxu0 0
    %515 = vmatprep.subr.bf16.mxu0 0
    %516 = vmatpush1.bf16.msra.mxu0 0
    %517 = vmatprep.mubr.bf16.mxu0 0
    %518 = vmatmul.mubr.bf16.gmra.mrb[0].mxu0 %v438
    %v519 = vpop.f32.mrb[0].mxu0
    %v520 = vadd.f32 %v422, %v519
    %v521 = vpop.f32.mrb[0].mxu0
    %v522 = vpop.f32.mrb[0].mxu0
    %v523 = vadd.f32 %v422, %v522
    %v524 = vpop.f32.mrb[0].mxu0
    %525 = vmatprep.mubr.bf16.mxu0 0
    %526 = vmatmul.mubr.bf16.gmra.mrb[0].mxu0 %v441
    %v527 = vpop.f32.mrb[0].mxu0
    %v528 = vadd.f32 %v422, %v527
    %v529 = vpop.f32.mrb[0].mxu0
    %v530 = vpop.f32.mrb[0].mxu0
    %v531 = vadd.f32 %v422, %v530
    %v532 = vpop.f32.mrb[0].mxu0
    %533 = vmatprep.mubr.bf16.mxu0 0
    %534 = vmatmul.mubr.bf16.gmra.mrb[0].mxu0 %v444
    %v535 = vpop.f32.mrb[0].mxu0
    %v536 = vadd.f32 %v422, %v535
    %v537 = vpop.f32.mrb[0].mxu0
    %v538 = vpop.f32.mrb[0].mxu0
    %v539 = vadd.f32 %v422, %v538
    %v540 = vpop.f32.mrb[0].mxu0
    %541 = vmatprep.mubr.bf16.mxu0 0
    %542 = vmatmul.mubr.bf16.gmra.mrb[0].mxu0 %v447
    %v543 = vpop.f32.mrb[0].mxu0
    %v544 = vadd.f32 %v422, %v543
    %v545 = vpop.f32.mrb[0].mxu0
    %v546 = vpop.f32.mrb[0].mxu0
    %v547 = vadd.f32 %v422, %v546
    %v548 = vpop.f32.mrb[0].mxu0
    %549 = vmatprep.mubr.bf16.mxu0 0
    %550 = vmatmul.mubr.bf16.gmra.mrb[0].mxu0 %v450
    %v551 = vpop.f32.mrb[0].mxu0
    %v552 = vadd.f32 %v422, %v551
    %v553 = vpop.f32.mrb[0].mxu0
    %v554 = vpop.f32.mrb[0].mxu0
    %v555 = vadd.f32 %v422, %v554
    %v556 = vpop.f32.mrb[0].mxu0
    %557 = vmatprep.mubr.bf16.mxu0 0
    %558 = vmatmul.mubr.bf16.gmra.mrb[0].mxu0 %v453
    %v559 = vpop.f32.mrb[0].mxu0
    %v560 = vadd.f32 %v422, %v559
    %v561 = vpop.f32.mrb[0].mxu0
    %v562 = vpop.f32.mrb[0].mxu0
    %v563 = vadd.f32 %v422, %v562
    %v564 = vpop.f32.mrb[0].mxu0
    %565 = vmatprep.mubr.bf16.mxu0 0
    %566 = vmatmul.mubr.bf16.gmra.mrb[0].mxu0 %v456
    %v567 = vpop.f32.mrb[0].mxu0
    %v568 = vadd.f32 %v422, %v567
    %v569 = vpop.f32.mrb[0].mxu0
    %v570 = vpop.f32.mrb[0].mxu0
    %v571 = vadd.f32 %v422, %v570
    %v572 = vpop.f32.mrb[0].mxu0
    %573 = vmatprep.mubr.bf16.mxu0 0
    %574 = vmatmul.mubr.bf16.gmra.mrb[0].mxu0 %v459
    %v575 = vpop.f32.mrb[0].mxu0
    %v576 = vadd.f32 %v422, %v575
    %v577 = vpop.f32.mrb[0].mxu0
    %v578 = vpop.f32.mrb[0].mxu0
    %v579 = vadd.f32 %v422, %v578
    %v580 = vpop.f32.mrb[0].mxu0
    %581 = vmatprep.mubr.bf16.mxu0 0
    %582 = vmatmul.mubr.bf16.gmra.mrb[0].mxu0 %v462
    %v583 = vpop.f32.mrb[0].mxu0
    %v584 = vadd.f32 %v422, %v583
    %v585 = vpop.f32.mrb[0].mxu0
    %v586 = vpop.f32.mrb[0].mxu0
    %v587 = vadd.f32 %v422, %v586
    %v588 = vpop.f32.mrb[0].mxu0
    %589 = vmatprep.mubr.bf16.mxu0 0
    %590 = vmatmul.mubr.bf16.gmra.mrb[0].mxu0 %v465
    %v591 = vpop.f32.mrb[0].mxu0
    %v592 = vadd.f32 %v422, %v591
    %v593 = vpop.f32.mrb[0].mxu0
    %v594 = vpop.f32.mrb[0].mxu0
    %v595 = vadd.f32 %v422, %v594
    %v596 = vpop.f32.mrb[0].mxu0
    %597 = vmatprep.mubr.bf16.mxu0 0
    %598 = vmatmul.mubr.bf16.gmra.mrb[0].mxu0 %v468
    %v599 = vpop.f32.mrb[0].mxu0
    %v600 = vadd.f32 %v422, %v599
    %v601 = vpop.f32.mrb[0].mxu0
    %v602 = vpop.f32.mrb[0].mxu0
    %v603 = vadd.f32 %v422, %v602
    %v604 = vpop.f32.mrb[0].mxu0
    %605 = vmatprep.mubr.bf16.mxu0 0
    %606 = vmatmul.mubr.bf16.gmra.mrb[0].mxu0 %v471
    %v607 = vpop.f32.mrb[0].mxu0
    %v608 = vadd.f32 %v422, %v607
    %v609 = vpop.f32.mrb[0].mxu0
    %v610 = vpop.f32.mrb[0].mxu0
    %v611 = vadd.f32 %v422, %v610
    %v612 = vpop.f32.mrb[0].mxu0
    %613 = vmatprep.mubr.bf16.mxu0 0
    %614 = vmatmul.mubr.bf16.gmra.mrb[0].mxu0 %v474
    %v615 = vpop.f32.mrb[0].mxu0
    %v616 = vadd.f32 %v422, %v615
    %v617 = vpop.f32.mrb[0].mxu0
    %v618 = vpop.f32.mrb[0].mxu0
    %v619 = vadd.f32 %v422, %v618
    %v620 = vpop.f32.mrb[0].mxu0
    %621 = vmatprep.mubr.bf16.mxu0 0
    %622 = vmatmul.mubr.bf16.gmra.mrb[0].mxu0 %v477
    %v623 = vpop.f32.mrb[0].mxu0
    %v624 = vadd.f32 %v422, %v623
    %v625 = vpop.f32.mrb[0].mxu0
    %v626 = vpop.f32.mrb[0].mxu0
    %v627 = vadd.f32 %v422, %v626
    %v628 = vpop.f32.mrb[0].mxu0
    %629 = vmatprep.mubr.bf16.mxu0 0
    %630 = vmatmul.mubr.bf16.gmra.mrb[0].mxu0 %v480
    %v631 = vpop.f32.mrb[0].mxu0
    %v632 = vadd.f32 %v422, %v631
    %v633 = vpop.f32.mrb[0].mxu0
    %v634 = vpop.f32.mrb[0].mxu0
    %v635 = vadd.f32 %v422, %v634
    %v636 = vpop.f32.mrb[0].mxu0
    %637 = vmatprep.mubr.bf16.mxu0 0
    %638 = vmatmul.mubr.bf16.gmra.mrb[0].mxu0 %v483
    %v639 = vpop.f32.mrb[0].mxu0
    %v640 = vadd.f32 %v422, %v639
    %v641 = vpop.f32.mrb[0].mxu0
    %v642 = vpop.f32.mrb[0].mxu0
    %v643 = vadd.f32 %v422, %v642
    %v644 = vpop.f32.mrb[0].mxu0
    %645 = vdwg.mxu0
    %v646 = vmax.f32 %v520, 0.0
    %v647 = vmax.f32 %v523, 0.0
    %v648 = vmax.f32 %v528, 0.0
    %v649 = vmax.f32 %v531, 0.0
    %v650 = vmax.f32 %v536, 0.0
    %v651 = vmax.f32 %v539, 0.0
    %v652 = vmax.f32 %v544, 0.0
    %v653 = vmax.f32 %v547, 0.0
    %v654 = vmax.f32 %v552, 0.0
    %v655 = vmax.f32 %v555, 0.0
    %v656 = vmax.f32 %v560, 0.0
    %v657 = vmax.f32 %v563, 0.0
    %v658 = vmax.f32 %v568, 0.0
    %v659 = vmax.f32 %v571, 0.0
    %v660 = vmax.f32 %v576, 0.0
    %v661 = vmax.f32 %v579, 0.0
    %v662 = vmax.f32 %v584, 0.0
    %v663 = vmax.f32 %v587, 0.0
    %v664 = vmax.f32 %v592, 0.0
    %v665 = vmax.f32 %v595, 0.0
    %v666 = vmax.f32 %v600, 0.0
    %v667 = vmax.f32 %v603, 0.0
    %v668 = vmax.f32 %v608, 0.0
    %v669 = vmax.f32 %v611, 0.0
    %v670 = vmax.f32 %v616, 0.0
    %v671 = vmax.f32 %v619, 0.0
    %v672 = vmax.f32 %v624, 0.0
    %v673 = vmax.f32 %v627, 0.0
    %v674 = vmax.f32 %v632, 0.0
    %v675 = vmax.f32 %v635, 0.0
    %v676 = vmax.f32 %v640, 0.0
    %v677 = vmax.f32 %v643, 0.0
    %v678 = vpack.c.bf16 %v647, %v646
    %v679 = vpack.c.bf16 %v649, %v648
    %v680 = vpack.c.bf16 %v651, %v650
    %v681 = vpack.c.bf16 %v653, %v652
    %v682 = vpack.c.bf16 %v655, %v654
    %v683 = vpack.c.bf16 %v657, %v656
    %v684 = vpack.c.bf16 %v659, %v658
    %v685 = vpack.c.bf16 %v661, %v660
    %v686 = vpack.c.bf16 %v663, %v662
    %v687 = vpack.c.bf16 %v665, %v664
    %v688 = vpack.c.bf16 %v667, %v666
    %v689 = vpack.c.bf16 %v669, %v668
    %v690 = vpack.c.bf16 %v671, %v670
    %v691 = vpack.c.bf16 %v673, %v672
    %v692 = vpack.c.bf16 %v675, %v674
    %v693 = vpack.c.bf16 %v677, %v676
    %v694 = vld [vmem:[%s5] sm:$0xf]
    %v695 = vld [vmem:[%s5 + $0x4] sm:$0xf]
    %v696 = vld [vmem:[%s5 + $0x8] sm:$0xf]
    %v697 = vld [vmem:[%s5 + $0xc] sm:$0xf]
    %v698 = vld [vmem:[%s6] sm:$0x1]
    %v700 = vlaneseq
    %v701 = vshrl.u32 %v700, 7
    %v702 = vsub.s32 0, %v701
    %v703 = vrot.slane %v698, %v702
    %v709 = vunpack.c.l.b16 %v694
    %v710 = vunpack.c.l.b16 %v695
    %v711 = vunpack.c.l.b16 %v696
    %v712 = vunpack.c.l.b16 %v697
    %v713 = vpack.c.b16 %v710, %v709
    %v714 = vpack.c.b16 %v712, %v711
    %v718 = vsel %vm436, %v678, 0
    %v721 = vsel %vm436, %v679, 0
    %v724 = vsel %vm436, %v680, 0
    %v727 = vsel %vm436, %v681, 0
    %v730 = vsel %vm436, %v682, 0
    %v733 = vsel %vm436, %v683, 0
    %v736 = vsel %vm436, %v684, 0
    %v739 = vsel %vm436, %v685, 0
    %v742 = vsel %vm436, %v686, 0
    %v745 = vsel %vm436, %v687, 0
    %v748 = vsel %vm436, %v688, 0
    %v751 = vsel %vm436, %v689, 0
    %v754 = vsel %vm436, %v690, 0
    %v757 = vsel %vm436, %v691, 0
    %v760 = vsel %vm436, %v692, 0
    %v763 = vsel %vm436, %v693, 0
    %765 = vmatprep.subr.bf16.mxu0 0
    %766 = vmatpush1.bf16.msra.mxu0 %v713
    %767 = vmatprep.subr.bf16.mxu0 0
    %768 = vmatpush1.bf16.msra.mxu0 %v714
    %769 = vmatprep.subr.bf16.mxu0 0
    %770 = vmatpush1.bf16.msra.mxu0 0
    %771 = vmatprep.subr.bf16.mxu0 0
    %772 = vmatpush1.bf16.msra.mxu0 0
    %773 = vmatprep.subr.bf16.mxu0 0
    %774 = vmatpush1.bf16.msra.mxu0 0
    %775 = vmatprep.subr.bf16.mxu0 0
    %776 = vmatpush1.bf16.msra.mxu0 0
    %777 = vmatprep.subr.bf16.mxu0 0
    %778 = vmatpush1.bf16.msra.mxu0 0
    %779 = vmatprep.subr.bf16.mxu0 0
    %780 = vmatpush1.bf16.msra.mxu0 0
    %781 = vmatprep.subr.bf16.mxu0 0
    %782 = vmatpush1.bf16.msra.mxu0 0
    %783 = vmatprep.subr.bf16.mxu0 0
    %784 = vmatpush1.bf16.msra.mxu0 0
    %785 = vmatprep.subr.bf16.mxu0 0
    %786 = vmatpush1.bf16.msra.mxu0 0
    %787 = vmatprep.subr.bf16.mxu0 0
    %788 = vmatpush1.bf16.msra.mxu0 0
    %789 = vmatprep.subr.bf16.mxu0 0
    %790 = vmatpush1.bf16.msra.mxu0 0
    %791 = vmatprep.subr.bf16.mxu0 0
    %792 = vmatpush1.bf16.msra.mxu0 0
    %793 = vmatprep.subr.bf16.mxu0 0
    %794 = vmatpush1.bf16.msra.mxu0 0
    %795 = vmatprep.subr.bf16.mxu0 0
    %796 = vmatpush1.bf16.msra.mxu0 0
    %797 = vmatprep.mubr.bf16.mxu0 0
    %798 = vmatmul.mubr.bf16.gmra.mrb[0].mxu0 %v718
    %v799 = vpop.f32.mrb[0].mxu0
    %v800 = vadd.f32 %v703, %v799
    %v801 = vpop.f32.mrb[0].mxu0
    %v802 = vpop.f32.mrb[0].mxu0
    %v803 = vadd.f32 %v703, %v802
    %v804 = vpop.f32.mrb[0].mxu0
    %805 = vmatprep.mubr.bf16.mxu0 0
    %806 = vmatmul.mubr.bf16.gmra.mrb[0].mxu0 %v721
    %v807 = vpop.f32.mrb[0].mxu0
    %v808 = vadd.f32 %v703, %v807
    %v809 = vpop.f32.mrb[0].mxu0
    %v810 = vpop.f32.mrb[0].mxu0
    %v811 = vadd.f32 %v703, %v810
    %v812 = vpop.f32.mrb[0].mxu0
    %813 = vmatprep.mubr.bf16.mxu0 0
    %814 = vmatmul.mubr.bf16.gmra.mrb[0].mxu0 %v724
    %v815 = vpop.f32.mrb[0].mxu0
    %v816 = vadd.f32 %v703, %v815
    %v817 = vpop.f32.mrb[0].mxu0
    %v818 = vpop.f32.mrb[0].mxu0
    %v819 = vadd.f32 %v703, %v818
    %v820 = vpop.f32.mrb[0].mxu0
    %821 = vmatprep.mubr.bf16.mxu0 0
    %822 = vmatmul.mubr.bf16.gmra.mrb[0].mxu0 %v727
    %v823 = vpop.f32.mrb[0].mxu0
    %v824 = vadd.f32 %v703, %v823
    %v825 = vpop.f32.mrb[0].mxu0
    %v826 = vpop.f32.mrb[0].mxu0
    %v827 = vadd.f32 %v703, %v826
    %v828 = vpop.f32.mrb[0].mxu0
    %829 = vmatprep.mubr.bf16.mxu0 0
    %830 = vmatmul.mubr.bf16.gmra.mrb[0].mxu0 %v730
    %v831 = vpop.f32.mrb[0].mxu0
    %v832 = vadd.f32 %v703, %v831
    %v833 = vpop.f32.mrb[0].mxu0
    %v834 = vpop.f32.mrb[0].mxu0
    %v835 = vadd.f32 %v703, %v834
    %v836 = vpop.f32.mrb[0].mxu0
    %837 = vmatprep.mubr.bf16.mxu0 0
    %838 = vmatmul.mubr.bf16.gmra.mrb[0].mxu0 %v733
    %v839 = vpop.f32.mrb[0].mxu0
    %v840 = vadd.f32 %v703, %v839
    %v841 = vpop.f32.mrb[0].mxu0
    %v842 = vpop.f32.mrb[0].mxu0
    %v843 = vadd.f32 %v703, %v842
    %v844 = vpop.f32.mrb[0].mxu0
    %845 = vmatprep.mubr.bf16.mxu0 0
    %846 = vmatmul.mubr.bf16.gmra.mrb[0].mxu0 %v736
    %v847 = vpop.f32.mrb[0].mxu0
    %v848 = vadd.f32 %v703, %v847
    %v849 = vpop.f32.mrb[0].mxu0
    %v850 = vpop.f32.mrb[0].mxu0
    %v851 = vadd.f32 %v703, %v850
    %v852 = vpop.f32.mrb[0].mxu0
    %853 = vmatprep.mubr.bf16.mxu0 0
    %854 = vmatmul.mubr.bf16.gmra.mrb[0].mxu0 %v739
    %v855 = vpop.f32.mrb[0].mxu0
    %v856 = vadd.f32 %v703, %v855
    %v857 = vpop.f32.mrb[0].mxu0
    %v858 = vpop.f32.mrb[0].mxu0
    %v859 = vadd.f32 %v703, %v858
    %v860 = vpop.f32.mrb[0].mxu0
    %861 = vmatprep.mubr.bf16.mxu0 0
    %862 = vmatmul.mubr.bf16.gmra.mrb[0].mxu0 %v742
    %v863 = vpop.f32.mrb[0].mxu0
    %v864 = vadd.f32 %v703, %v863
    %v865 = vpop.f32.mrb[0].mxu0
    %v866 = vpop.f32.mrb[0].mxu0
    %v867 = vadd.f32 %v703, %v866
    %v868 = vpop.f32.mrb[0].mxu0
    %869 = vmatprep.mubr.bf16.mxu0 0
    %870 = vmatmul.mubr.bf16.gmra.mrb[0].mxu0 %v745
    %v871 = vpop.f32.mrb[0].mxu0
    %v872 = vadd.f32 %v703, %v871
    %v873 = vpop.f32.mrb[0].mxu0
    %v874 = vpop.f32.mrb[0].mxu0
    %v875 = vadd.f32 %v703, %v874
    %v876 = vpop.f32.mrb[0].mxu0
    %877 = vmatprep.mubr.bf16.mxu0 0
    %878 = vmatmul.mubr.bf16.gmra.mrb[0].mxu0 %v748
    %v879 = vpop.f32.mrb[0].mxu0
    %v880 = vadd.f32 %v703, %v879
    %v881 = vpop.f32.mrb[0].mxu0
    %v882 = vpop.f32.mrb[0].mxu0
    %v883 = vadd.f32 %v703, %v882
    %v884 = vpop.f32.mrb[0].mxu0
    %885 = vmatprep.mubr.bf16.mxu0 0
    %886 = vmatmul.mubr.bf16.gmra.mrb[0].mxu0 %v751
    %v887 = vpop.f32.mrb[0].mxu0
    %v888 = vadd.f32 %v703, %v887
    %v889 = vpop.f32.mrb[0].mxu0
    %v890 = vpop.f32.mrb[0].mxu0
    %v891 = vadd.f32 %v703, %v890
    %v892 = vpop.f32.mrb[0].mxu0
    %893 = vmatprep.mubr.bf16.mxu0 0
    %894 = vmatmul.mubr.bf16.gmra.mrb[0].mxu0 %v754
    %v895 = vpop.f32.mrb[0].mxu0
    %v896 = vadd.f32 %v703, %v895
    %v897 = vpop.f32.mrb[0].mxu0
    %v898 = vpop.f32.mrb[0].mxu0
    %v899 = vadd.f32 %v703, %v898
    %v900 = vpop.f32.mrb[0].mxu0
    %901 = vmatprep.mubr.bf16.mxu0 0
    %902 = vmatmul.mubr.bf16.gmra.mrb[0].mxu0 %v757
    %v903 = vpop.f32.mrb[0].mxu0
    %v904 = vadd.f32 %v703, %v903
    %v905 = vpop.f32.mrb[0].mxu0
    %v906 = vpop.f32.mrb[0].mxu0
    %v907 = vadd.f32 %v703, %v906
    %v908 = vpop.f32.mrb[0].mxu0
    %909 = vmatprep.mubr.bf16.mxu0 0
    %910 = vmatmul.mubr.bf16.gmra.mrb[0].mxu0 %v760
    %v911 = vpop.f32.mrb[0].mxu0
    %v912 = vadd.f32 %v703, %v911
    %v913 = vpop.f32.mrb[0].mxu0
    %v914 = vpop.f32.mrb[0].mxu0
    %v915 = vadd.f32 %v703, %v914
    %v916 = vpop.f32.mrb[0].mxu0
    %917 = vmatprep.mubr.bf16.mxu0 0
    %918 = vmatmul.mubr.bf16.gmra.mrb[0].mxu0 %v763
    %v919 = vpop.f32.mrb[0].mxu0
    %v920 = vadd.f32 %v703, %v919
    %v921 = vpop.f32.mrb[0].mxu0
    %v922 = vpop.f32.mrb[0].mxu0
    %v923 = vadd.f32 %v703, %v922
    %v924 = vpop.f32.mrb[0].mxu0
    %925 = vdwg.mxu0
    %926 = vst [vmem:[#allocation2] sm:$0xff] %v800
    %927 = vst [vmem:[#allocation2 + $0x8] sm:$0xff] %v803
    %928 = vst [vmem:[#allocation2 + $0x10] sm:$0xff] %v808
    %929 = vst [vmem:[#allocation2 + $0x18] sm:$0xff] %v811
    %930 = vst [vmem:[#allocation2 + $0x20] sm:$0xff] %v816
    %931 = vst [vmem:[#allocation2 + $0x28] sm:$0xff] %v819
    %932 = vst [vmem:[#allocation2 + $0x30] sm:$0xff] %v824
    %933 = vst [vmem:[#allocation2 + $0x38] sm:$0xff] %v827
    %934 = vst [vmem:[#allocation2 + $0x40] sm:$0xff] %v832
    %935 = vst [vmem:[#allocation2 + $0x48] sm:$0xff] %v835
    %936 = vst [vmem:[#allocation2 + $0x50] sm:$0xff] %v840
    %937 = vst [vmem:[#allocation2 + $0x58] sm:$0xff] %v843
    %938 = vst [vmem:[#allocation2 + $0x60] sm:$0xff] %v848
    %939 = vst [vmem:[#allocation2 + $0x68] sm:$0xff] %v851
    %940 = vst [vmem:[#allocation2 + $0x70] sm:$0xff] %v856
    %941 = vst [vmem:[#allocation2 + $0x78] sm:$0xff] %v859
    %942 = vst [vmem:[#allocation2 + $0x80] sm:$0xff] %v864
    %943 = vst [vmem:[#allocation2 + $0x88] sm:$0xff] %v867
    %944 = vst [vmem:[#allocation2 + $0x90] sm:$0xff] %v872
    %945 = vst [vmem:[#allocation2 + $0x98] sm:$0xff] %v875
    %946 = vst [vmem:[#allocation2 + $0xa0] sm:$0xff] %v880
    %947 = vst [vmem:[#allocation2 + $0xa8] sm:$0xff] %v883
    %948 = vst [vmem:[#allocation2 + $0xb0] sm:$0xff] %v888
    %949 = vst [vmem:[#allocation2 + $0xb8] sm:$0xff] %v891
    %950 = vst [vmem:[#allocation2 + $0xc0] sm:$0xff] %v896
    %951 = vst [vmem:[#allocation2 + $0xc8] sm:$0xff] %v899
    %952 = vst [vmem:[#allocation2 + $0xd0] sm:$0xff] %v904
    %953 = vst [vmem:[#allocation2 + $0xd8] sm:$0xff] %v907
    %954 = vst [vmem:[#allocation2 + $0xe0] sm:$0xff] %v912
    %955 = vst [vmem:[#allocation2 + $0xe8] sm:$0xff] %v915
    %956 = vst [vmem:[#allocation2 + $0xf0] sm:$0xff] %v920
    %957 = vst [vmem:[#allocation2 + $0xf8] sm:$0xff] %v923
    // Predicated region
    $region30: #{tpu_custom_call.1} parent=1 // pred_check
      _
    $region31: #{tpu_custom_call.1} parent=1 // pred_check_branch
      %959 = sbr.rel (0) target = $region33
    $region32: #{tpu_custom_call.1} parent=1 // pred_region
      %s961 = ssub.s32 4096, 4096
      %962 = vsyncadd [#allocation3], %s961
      %s963 = sshll.u32 [#allocation2], 4
      %s964 = int_to_ptr.vmem [resolvable:$true] %s963
      %969 = dma.vmem_to_hbm [thread:$0]  %s964, 4096, %s7, [#allocation3], 128, 128, 8
    $region33: #{tpu_custom_call.1} parent=1 // pred_fallthru
      _
    // Predicated region
    $region34: #{tpu_custom_call.1} parent=1 // pred_check
      _
    $region35: #{tpu_custom_call.1} parent=1 // pred_check_branch
      %971 = sbr.rel (0) target = $region37
    $region36: #{tpu_custom_call.1} parent=1 // pred_region
      %972 = dma.done [#allocation3], 4096
    $region37: #{tpu_custom_call.1} parent=1 // pred_fallthru
      _
    %973 = vsyncpa [#allocation3], 1

</llo_original>
